<compile_context>
chip_gen: v7x
topology: tpu7x:2x2x1
jax: 0.10.0
libtpu: 0.0.40
codegen_flags: <defaults>
</compile_context>

<pallas_src>
import jax
import jax.numpy as jnp
from jax.experimental import pallas as pl
from jax.experimental.pallas import tpu as pltpu

BN_EPS = 1e-5
LEAKY_SLOPE = 0.01
IN_F = 256
HID_F = 64
OUT_F = 10
OUT_PAD = 128                 # lane-dense padded output width
TM_DEFAULT = 4096             # batch tile (rows); x tile = 4 MiB f32
NUM_STAT_SPLITS = 2           # per-core partial-stat groups (v7x megacore); no-op on 1-TC chips
VMEM_LIMIT = 32 * 1024 * 1024 # explicit scoped-VMEM limit (needed on v5e for tm > ~2048)


def _round_up(a, m):
    return ((a + m - 1) // m) * m


def _tile_map(n_inner):
    # (core c, inner tile i) -> global batch-tile block index
    return lambda c, i: (c * n_inner + i, 0)


# ---------- pass 1: h = x @ W1 (materialized) + pivot-shifted batch stats ----------
def _fc1_stats_kernel(x_ref, w1_ref, pivot_ref, h_ref, sumd_ref, sumsqd_ref):
    @pl.when(pl.program_id(1) == 0)          # first tile of this core's sweep
    def _init():
        sumd_ref[...] = jnp.zeros_like(sumd_ref)
        sumsqd_ref[...] = jnp.zeros_like(sumsqd_ref)

    h = jnp.dot(x_ref[...], w1_ref[...], preferred_element_type=jnp.float32)
    h_ref[...] = h                            # materialize h for pass 2 (no x re-read)
    d = h - pivot_ref[...]                    # shifted values -> stable variance
    # (1, 64) row-sums broadcast-accumulate into the (1, 8, 64) per-core block
    sumd_ref[...] += jnp.sum(d, axis=0, keepdims=True)
    sumsqd_ref[...] += jnp.sum(d * d, axis=0, keepdims=True)


# ---------- pass 2: fused BN (scale/shift) + leaky_relu + fc4 ----------
def _bn_act_fc4_kernel(h_ref, scale_ref, shift_ref, w4_ref, b4_ref, out_ref):
    h = h_ref[...] * scale_ref[...] + shift_ref[...]   # folded BatchNorm
    h = jnp.maximum(h, LEAKY_SLOPE * h)                # leaky_relu
    out_ref[...] = (
        jnp.dot(h, w4_ref[...], preferred_element_type=jnp.float32) + b4_ref[...]
    )


def classifier_forward(x, params, tm_max=TM_DEFAULT):
    """Forward pass of Classifier (training-mode BatchNorm with batch stats)."""
    w1, b1, gamma, beta, w4, b4 = params
    del b1  # cancelled exactly by training-mode BN mean subtraction
    B, F = x.shape
    assert F == IN_F, f"expected {IN_F} input features, got {F}"

    # Tile size: always a multiple of 8 (sublane), capped by tm_max and batch.
    tm = _round_up(min(tm_max, max(B, 8)), 8)
    n_tiles = pl.cdiv(B, tm)
    # Keep the tile count divisible by the parallel core-split of pass 1.
    n_tiles = _round_up(n_tiles, NUM_STAT_SPLITS)
    n_half = n_tiles // NUM_STAT_SPLITS
    b_pad = n_tiles * tm
    n_pad_rows = b_pad - B

    x32 = x.astype(jnp.float32)
    w1 = jnp.asarray(w1, jnp.float32)

    # Per-feature pivot ~ batch mean of h, from the first <=128 real rows (tiny XLA op).
    n0 = min(B, 128)
    pivot = jnp.mean(x32[:n0] @ w1, axis=0, keepdims=True)      # (1, HID_F)

    if n_pad_rows:
        # Zero rows give h == 0 exactly (no fc1 bias in-kernel); their shifted
        # contribution is (-pivot, pivot^2) per row and is corrected below.
        x32 = jnp.pad(x32, ((0, n_pad_rows), (0, 0)))

    # ---- pass 1 ----
    h, sum_d, sumsq_d = pl.pallas_call(
        _fc1_stats_kernel,
        out_shape=(
            jax.ShapeDtypeStruct((b_pad, HID_F), jnp.float32),
            jax.ShapeDtypeStruct((NUM_STAT_SPLITS, 8, HID_F), jnp.float32),
            jax.ShapeDtypeStruct((NUM_STAT_SPLITS, 8, HID_F), jnp.float32),
        ),
        grid=(NUM_STAT_SPLITS, n_half),
        in_specs=[
            pl.BlockSpec((tm, IN_F), _tile_map(n_half)),
            pl.BlockSpec((IN_F, HID_F), lambda c, i: (0, 0)),
            pl.BlockSpec((1, HID_F), lambda c, i: (0, 0)),
        ],
        out_specs=(
            pl.BlockSpec((tm, HID_F), _tile_map(n_half)),
            pl.BlockSpec((1, 8, HID_F), lambda c, i: (c, 0, 0)),
            pl.BlockSpec((1, 8, HID_F), lambda c, i: (c, 0, 0)),
        ),
        compiler_params=pltpu.CompilerParams(
            dimension_semantics=("parallel", "arbitrary"),
            vmem_limit_bytes=VMEM_LIMIT),
    )(x32, w1, pivot)

    # ---- fold BN scale/shift from the partial shifted sums (tiny, plain JAX) ----
    # Every sublane row of each per-core block holds the same accumulated value.
    S = jnp.sum(sum_d[:, 0, :], axis=0, keepdims=True) + n_pad_rows * pivot
    Q = jnp.sum(sumsq_d[:, 0, :], axis=0, keepdims=True) - n_pad_rows * pivot * pivot
    mean_d = S / B                                   # E[h - pivot] over real rows
    mean = pivot + mean_d
    var = jnp.maximum(Q / B - mean_d * mean_d, 0.0)  # biased batch variance
    scale = jnp.reshape(gamma, (1, HID_F)) * jax.lax.rsqrt(var + BN_EPS)
    shift = jnp.reshape(beta, (1, HID_F)) - mean * scale

    # Pad fc4 params to 128 output lanes -> dense (unmasked) output stores.
    w4p = jnp.zeros((HID_F, OUT_PAD), jnp.float32).at[:, :OUT_F].set(w4)
    b4p = jnp.zeros((1, OUT_PAD), jnp.float32).at[:, :OUT_F].set(
        jnp.reshape(b4, (1, OUT_F)))

    # ---- pass 2 ----
    out_pad = pl.pallas_call(
        _bn_act_fc4_kernel,
        out_shape=jax.ShapeDtypeStruct((b_pad, OUT_PAD), jnp.float32),
        grid=(n_tiles,),
        in_specs=[
            pl.BlockSpec((tm, HID_F), lambda i: (i, 0)),
            pl.BlockSpec((1, HID_F), lambda i: (0, 0)),
            pl.BlockSpec((1, HID_F), lambda i: (0, 0)),
            pl.BlockSpec((HID_F, OUT_PAD), lambda i: (0, 0)),
            pl.BlockSpec((1, OUT_PAD), lambda i: (0, 0)),
        ],
        out_specs=pl.BlockSpec((tm, OUT_PAD), lambda i: (i, 0)),
        compiler_params=pltpu.CompilerParams(
            dimension_semantics=("parallel",),
            vmem_limit_bytes=VMEM_LIMIT),
    )(h, scale, shift, w4p, b4p)

    return out_pad[:B, :OUT_F]


def init_params(key):
    """Deterministic parameter init mimicking PyTorch Linear/BatchNorm shapes."""
    k1, k2, k3, k4 = jax.random.split(key, 4)
    bound1 = 1.0 / jnp.sqrt(256.0)
    w1 = jax.random.uniform(k1, (IN_F, HID_F), jnp.float32, -bound1, bound1)
    b1 = jax.random.uniform(k2, (1, HID_F), jnp.float32, -bound1, bound1)
    gamma = jnp.ones((1, HID_F), jnp.float32)
    beta = jnp.zeros((1, HID_F), jnp.float32)
    bound4 = 1.0 / jnp.sqrt(64.0)
    w4 = jax.random.uniform(k3, (HID_F, OUT_F), jnp.float32, -bound4, bound4)
    b4 = jax.random.uniform(k4, (1, OUT_F), jnp.float32, -bound4, bound4)
    return (w1, b1, gamma, beta, w4, b4)


def _reference(x, params):
    """Plain-JAX reference matching PyTorch training-mode forward exactly."""
    w1, b1, gamma, beta, w4, b4 = params
    h = x @ w1 + b1
    mu = h.mean(0, keepdims=True)
    var = ((h - mu) ** 2).mean(0, keepdims=True)      # biased variance
    h = (h - mu) * jax.lax.rsqrt(var + BN_EPS) * gamma + beta
    h = jnp.where(h >= 0, h, LEAKY_SLOPE * h)
    return h @ w4 + b4


if __name__ == "__main__":
    key = jax.random.PRNGKey(0)
    pkey, xkey = jax.random.split(key)
    params = init_params(pkey)

    B = 12  # small batch (feature dim 256 is fixed by the module)
    x = jax.random.normal(xkey, (B, IN_F), jnp.float32)
    ref = _reference(x, params)

    # Default tiling (one tile per core group, padded rows).
    out = jax.block_until_ready(classifier_forward(x, params))
    assert out.shape == (B, OUT_F)
    assert jnp.allclose(out, ref, atol=1e-4, rtol=1e-4), "mismatch (default tiles)"

    # Force small tiles to exercise cross-tile accumulation + zero-row padding.
    out2 = jax.block_until_ready(classifier_forward(x, params, tm_max=8))
    assert jnp.allclose(out2, ref, atol=1e-4, rtol=1e-4), "mismatch (tm=8)"

    # Multiple inner tiles per core group (odd tile count rounded up) + uncentered
    # inputs to exercise the pivot-shifted statistics.
    B3 = 40
    x3 = jax.random.normal(jax.random.PRNGKey(3), (B3, IN_F), jnp.float32) + 5.0
    ref3 = _reference(x3, params)
    out3 = jax.block_until_ready(classifier_forward(x3, params, tm_max=8))
    assert jnp.allclose(out3, ref3, atol=1e-4, rtol=1e-4), "mismatch (B=40, tm=8)"

    print("KERNEL_OK")
</pallas_src>

<mosaic_0001>
module attributes {stable_mosaic.version = 11 : i64} {
  func.func @_fc1_stats_kernel(%arg0: i32, %arg1: i32, %arg2: memref<16x256xf32, #tpu.memory_space<vmem>>, %arg3: memref<256x64xf32, #tpu.memory_space<vmem>>, %arg4: memref<1x64xf32, #tpu.memory_space<vmem>>, %arg5: memref<16x64xf32, #tpu.memory_space<vmem>>, %arg6: memref<1x8x64xf32, #tpu.memory_space<vmem>>, %arg7: memref<1x8x64xf32, #tpu.memory_space<vmem>>) attributes {dimension_semantics = [#tpu.dimension_semantics<parallel>, #tpu.dimension_semantics<arbitrary>], iteration_bounds = array<i64: 2, 1>, scalar_prefetch = 0 : i64, scratch_operands = 0 : i64, tpu.core_type = #tpu.core_type<tc>, window_params = [{transform_indices = @transform_0, window_bounds = array<i64: 16, 256>}, {pipeline_mode = #tpu.pipeline_mode<synchronous>, transform_indices = @transform_1, window_bounds = array<i64: 256, 64>}, {pipeline_mode = #tpu.pipeline_mode<synchronous>, transform_indices = @transform_2, window_bounds = array<i64: 1, 64>}, {transform_indices = @transform_3, window_bounds = array<i64: 16, 64>}, {transform_indices = @transform_4, window_bounds = array<i64: 1, 8, 64>}, {transform_indices = @transform_5, window_bounds = array<i64: 1, 8, 64>}]} {
    %c0_i32 = arith.constant 0 : i32
    %0 = arith.cmpi eq, %arg1, %c0_i32 : i32
    %1 = arith.extui %0 : i1 to i32
    %c0_i32_0 = arith.constant 0 : i32
    %2 = arith.cmpi ne, %1, %c0_i32_0 : i32
    scf.if %2 {
      %cst_22 = arith.constant 0.000000e+00 : f32
      %25 = vector.broadcast %cst_22 : f32 to vector<1x8x64xf32>
      %c0_23 = arith.constant 0 : index
      %c0_24 = arith.constant 0 : index
      %c0_25 = arith.constant 0 : index
      %26 = vector.load %arg6[%c0_23, %c0_24, %c0_25] : memref<1x8x64xf32, #tpu.memory_space<vmem>>, vector<1x8x64xf32>
      tpu.vector_store %arg6[%c0_23, %c0_24, %c0_25], %25 {strides = array<i32>} : memref<1x8x64xf32, #tpu.memory_space<vmem>>, vector<1x8x64xf32>,
      %cst_26 = arith.constant 0.000000e+00 : f32
      %27 = vector.broadcast %cst_26 : f32 to vector<1x8x64xf32>
      %c0_27 = arith.constant 0 : index
      %c0_28 = arith.constant 0 : index
      %c0_29 = arith.constant 0 : index
      %28 = vector.load %arg7[%c0_27, %c0_28, %c0_29] : memref<1x8x64xf32, #tpu.memory_space<vmem>>, vector<1x8x64xf32>
      tpu.vector_store %arg7[%c0_27, %c0_28, %c0_29], %27 {strides = array<i32>} : memref<1x8x64xf32, #tpu.memory_space<vmem>>, vector<1x8x64xf32>,
    } else {
    }
    %c0 = arith.constant 0 : index
    %c0_1 = arith.constant 0 : index
    %3 = vector.load %arg2[%c0, %c0_1] : memref<16x256xf32, #tpu.memory_space<vmem>>, vector<16x256xf32>
    %c0_2 = arith.constant 0 : index
    %c0_3 = arith.constant 0 : index
    %4 = vector.load %arg3[%c0_2, %c0_3] : memref<256x64xf32, #tpu.memory_space<vmem>>, vector<256x64xf32>
    %cst = arith.constant dense<0.000000e+00> : vector<16x64xf32>
    %5 = tpu.matmul %3, %4, %cst {dimension_numbers = #tpu.dot_dimension_numbers<[1], [0], [0], [1], [0, 0, 1, 1], [], []>} : vector<16x256xf32>, vector<256x64xf32>, vector<16x64xf32> -> vector<16x64xf32>
    %c0_4 = arith.constant 0 : index
    %c0_5 = arith.constant 0 : index
    %6 = vector.load %arg5[%c0_4, %c0_5] : memref<16x64xf32, #tpu.memory_space<vmem>>, vector<16x64xf32>
    tpu.vector_store %arg5[%c0_4, %c0_5], %5 {strides = array<i32>} : memref<16x64xf32, #tpu.memory_space<vmem>>, vector<16x64xf32>,
    %c0_6 = arith.constant 0 : index
    %c0_7 = arith.constant 0 : index
    %7 = vector.load %arg4[%c0_6, %c0_7] : memref<1x64xf32, #tpu.memory_space<vmem>>, vector<1x64xf32>
    %8 = vector.broadcast %7 : vector<1x64xf32> to vector<16x64xf32>
    %9 = arith.subf %5, %8 : vector<16x64xf32>
    %c0_8 = arith.constant 0 : index
    %c0_9 = arith.constant 0 : index
    %c0_10 = arith.constant 0 : index
    %10 = vector.load %arg6[%c0_8, %c0_9, %c0_10] : memref<1x8x64xf32, #tpu.memory_space<vmem>>, vector<1x8x64xf32>
    %cst_11 = arith.constant dense<0.000000e+00> : vector<64xf32>
    %11 = vector.multi_reduction <add>, %9, %cst_11 [0] : vector<16x64xf32> to vector<64xf32>
    %12 = vector.shape_cast %11 : vector<64xf32> to vector<1x64xf32>
    %13 = vector.shape_cast %12 : vector<1x64xf32> to vector<1x1x64xf32>
    %14 = vector.broadcast %13 : vector<1x1x64xf32> to vector<1x8x64xf32>
    %15 = arith.addf %10, %14 : vector<1x8x64xf32>
    %c0_12 = arith.constant 0 : index
    %c0_13 = arith.constant 0 : index
    %c0_14 = arith.constant 0 : index
    %16 = vector.load %arg6[%c0_12, %c0_13, %c0_14] : memref<1x8x64xf32, #tpu.memory_space<vmem>>, vector<1x8x64xf32>
    tpu.vector_store %arg6[%c0_12, %c0_13, %c0_14], %15 {strides = array<i32>} : memref<1x8x64xf32, #tpu.memory_space<vmem>>, vector<1x8x64xf32>,
    %c0_15 = arith.constant 0 : index
    %c0_16 = arith.constant 0 : index
    %c0_17 = arith.constant 0 : index
    %17 = vector.load %arg7[%c0_15, %c0_16, %c0_17] : memref<1x8x64xf32, #tpu.memory_space<vmem>>, vector<1x8x64xf32>
    %18 = arith.mulf %9, %9 : vector<16x64xf32>
    %cst_18 = arith.constant dense<0.000000e+00> : vector<64xf32>
    %19 = vector.multi_reduction <add>, %18, %cst_18 [0] : vector<16x64xf32> to vector<64xf32>
    %20 = vector.shape_cast %19 : vector<64xf32> to vector<1x64xf32>
    %21 = vector.shape_cast %20 : vector<1x64xf32> to vector<1x1x64xf32>
    %22 = vector.broadcast %21 : vector<1x1x64xf32> to vector<1x8x64xf32>
    %23 = arith.addf %17, %22 : vector<1x8x64xf32>
    %c0_19 = arith.constant 0 : index
    %c0_20 = arith.constant 0 : index
    %c0_21 = arith.constant 0 : index
    %24 = vector.load %arg7[%c0_19, %c0_20, %c0_21] : memref<1x8x64xf32, #tpu.memory_space<vmem>>, vector<1x8x64xf32>
    tpu.vector_store %arg7[%c0_19, %c0_20, %c0_21], %23 {strides = array<i32>} : memref<1x8x64xf32, #tpu.memory_space<vmem>>, vector<1x8x64xf32>,
    return
  }
  func.func @transform_0(%arg0: i32, %arg1: i32) -> (i32, i32) {
    %c1_i32 = arith.constant 1 : i32
    %0 = arith.muli %arg0, %c1_i32 : i32
    %1 = arith.addi %0, %arg1 : i32
    %c0_i32 = arith.constant 0 : i32
    %c0_i32_0 = arith.constant 0 : i32
    return %1, %c0_i32 : i32, i32
  }
  func.func @transform_1(%arg0: i32, %arg1: i32) -> (i32, i32) {
    %c0_i32 = arith.constant 0 : i32
    %c0_i32_0 = arith.constant 0 : i32
    %c0_i32_1 = arith.constant 0 : i32
    return %c0_i32, %c0_i32_0 : i32, i32
  }
  func.func @transform_2(%arg0: i32, %arg1: i32) -> (i32, i32) {
    %c0_i32 = arith.constant 0 : i32
    %c0_i32_0 = arith.constant 0 : i32
    %c0_i32_1 = arith.constant 0 : i32
    return %c0_i32, %c0_i32_0 : i32, i32
  }
  func.func @transform_3(%arg0: i32, %arg1: i32) -> (i32, i32) {
    %c1_i32 = arith.constant 1 : i32
    %0 = arith.muli %arg0, %c1_i32 : i32
    %1 = arith.addi %0, %arg1 : i32
    %c0_i32 = arith.constant 0 : i32
    %c0_i32_0 = arith.constant 0 : i32
    return %1, %c0_i32 : i32, i32
  }
  func.func @transform_4(%arg0: i32, %arg1: i32) -> (i32, i32, i32) {
    %c0_i32 = arith.constant 0 : i32
    %c0_i32_0 = arith.constant 0 : i32
    %c0_i32_1 = arith.constant 0 : i32
    return %arg0, %c0_i32, %c0_i32_0 : i32, i32, i32
  }
  func.func @transform_5(%arg0: i32, %arg1: i32) -> (i32, i32, i32) {
    %c0_i32 = arith.constant 0 : i32
    %c0_i32_0 = arith.constant 0 : i32
    %c0_i32_1 = arith.constant 0 : i32
    return %arg0, %c0_i32, %c0_i32_0 : i32, i32, i32
  }
}

</mosaic_0001>

<llo_original>
// kernel: tpu_custom_call.1
$region0: #{tpu_custom_call.1}
  #allocation0 [shape = 'u32[]', space=smem, size = 0x4, offset = 0x4, fixed_abs, tag = 'smem constant byte address 0x4 - core index']
  #allocation1 [shape = 'u32[144,128]{1,0:T(1,128)}', space=vmem, size = 0x12000, scoped, tag = 'internal scratch']
  %s0 = inlined_call_operand.vmem [shape: f32[32,256], index: 0, kind: input, shape index: {}]
  %s1 = inlined_call_operand.vmem [shape: f32[256,64], index: 1, kind: input, shape index: {}]
  %s2 = inlined_call_operand.vmem [shape: f32[1,64], index: 2, kind: input, shape index: {}]
  %s3 = inlined_call_operand.hbm [shape: f32[32,64], index: 3, kind: output, shape index: {0}]
  %s4 = inlined_call_operand.hbm [shape: f32[2,8,64], index: 4, kind: output, shape index: {1}]
  %s5 = inlined_call_operand.hbm [shape: f32[2,8,64], index: 5, kind: output, shape index: {2}]
  %6 = xla_tuple %s3, %s4, %s5
  %s7 = sld [smem:[#allocation0]]
  $region65: #{tpu_custom_call.1} parent=0
    _
  %s9 = ssub.s32 1, %s7
  %s10 = scalar_select 0, %s9, %s7
  $region1: #{tpu_custom_call.1} parent=0
    #allocation2 [shape = 'u8[16384]{0}', space=vmem, size = 0x4000, scoped, tag = 'output window, operand 0']
    #allocation3 [shape = 's32[2]{0}', space=sflag, size = 0x8, scoped, tag = 'scoped memory for tpu_custom_call.1']
    #allocation4 [shape = 'u8[8192]{0}', space=vmem, size = 0x2000, scoped, tag = 'output window, operand 1']
    #allocation5 [shape = 's32[2]{0}', space=sflag, size = 0x8, scoped, tag = 'scoped memory for tpu_custom_call.1']
    #allocation6 [shape = 'u8[8192]{0}', space=vmem, size = 0x2000, scoped, tag = 'output window, operand 2']
    %11 = vsyncpa [#allocation3], 0
    %s12 = scalar_lea.sflag [#allocation3], 1
    %13 = vsyncpa %s12, 0
    %14 = vsyncpa [#allocation5], 0
    %s15 = scalar_lea.sflag [#allocation5], 1
    %16 = vsyncpa %s15, 0
    loop: start=0, step=1, limit=4
    $region2: #{tpu_custom_call.1} parent=1 // loop_pre_header
      _
    $region3: #{tpu_custom_call.1} parent=1 // loop_header
      %s18 = sphi 0, %s22
      %p19 = scmp.ge.s32.totalorder %s18, 4
      %s25 = sphi 0, %s37
      %s26 = sphi 0, %s33
      %s27 = sphi 0, %s25
      %s28 = sphi 0, %s26
      %s29 = sphi 0, %s27
      %s30 = sphi 0, %s28
      %s42 = sphi 0, %s44
      %s45 = sphi 0, %s42
      %s46 = sphi 0, %s45
      %s62 = sphi 0, %s46
      %s66 = sphi 0, %s66
      %s68 = sphi 0, %s66
      %s69 = sphi 0, %s68
      %s83 = sphi 0, %s69
      %s87 = sphi 0, %s87
      %s89 = sphi 0, %s87
      %s90 = sphi 0, %s89
      %s104 = sphi 0, %s90
      %s112 = sphi 0, %s114
      %s115 = sphi 0, %s112
      %s116 = sphi 0, %s115
      %s132 = sphi 0, %s116
      %s138 = sphi 0, %s140
      %s141 = sphi 0, %s138
      %s142 = sphi 0, %s141
      %s158 = sphi 0, %s142
      %s164 = sphi 0, %s166
      %s167 = sphi 0, %s164
      %s168 = sphi 0, %s167
      %s184 = sphi 0, %s168
    $region4: #{tpu_custom_call.1} parent=1 // loop_header_branch
      %21 = sbr.rel (%p19) target = $region8
    $region5: #{tpu_custom_call.1} parent=1 // loop_body
      %s23 = ssub.s32 %s18, 1
      %s24 = ssub.s32 %s18, 2
      %s31 = sadd.s32 1, %s26
      %p32 = scmp.ge.s32.totalorder %s31, 1
      %s33 = scalar_select %p32, 0, %s31
      %s34 = sadd.s32 1, %s25
      %s35 = scalar_select %p32, %s34, %s25
      %p36 = scmp.ge.s32.totalorder %s35, 2
      %s37 = scalar_select %p36, 0, %s35
      %s38 = sadd.s32 %s25, %s26
      %s39 = sadd.s32 %s37, %s33
      %s40 = ssub.s32 %s38, %s39
      %p41 = scmp.eq.s32.totalorder %s40, 0
      %s43 = sadd.s32 %s42, 1
      %s44 = scalar_select %p41, %s42, %s43
      %p47 = pneg %p41
      %p48 = scmp.eq.s32.totalorder %s18, 1
      %p49 = por %p47, %p48
      %p50 = scmp.ne.s32.totalorder %s42, %s45
      %p51 = scmp.eq.s32.totalorder %s18, 0
      %p52 = por %p50, %p51
      %p53 = scmp.ne.s32.totalorder %s42, %s45
      %p54 = scmp.eq.s32.totalorder %s23, 1
      %p55 = por %p53, %p54
      %p56 = scmp.ne.s32.totalorder %s45, %s46
      %p57 = scmp.eq.s32.totalorder %s23, 0
      %p58 = por %p56, %p57
      %p59 = scmp.ne.s32.totalorder %s45, %s46
      %p60 = scmp.eq.s32.totalorder %s24, 1
      %p61 = por %p59, %p60
      %p63 = scmp.ne.s32.totalorder %s46, %s62
      %p64 = scmp.eq.s32.totalorder %s24, 0
      %p65 = por %p63, %p64
      %s67 = sadd.s32 %s66, 1
      %p70 = scmp.eq.s32.totalorder %s18, 1
      %p71 = scmp.ne.s32.totalorder %s66, %s68
      %p72 = scmp.eq.s32.totalorder %s18, 0
      %p73 = por %p71, %p72
      %p74 = scmp.ne.s32.totalorder %s66, %s68
      %p75 = scmp.eq.s32.totalorder %s23, 1
      %p76 = por %p74, %p75
      %p77 = scmp.ne.s32.totalorder %s68, %s69
      %p78 = scmp.eq.s32.totalorder %s23, 0
      %p79 = por %p77, %p78
      %p80 = scmp.ne.s32.totalorder %s68, %s69
      %p81 = scmp.eq.s32.totalorder %s24, 1
      %p82 = por %p80, %p81
      %p84 = scmp.ne.s32.totalorder %s69, %s83
      %p85 = scmp.eq.s32.totalorder %s24, 0
      %p86 = por %p84, %p85
      %s88 = sadd.s32 %s87, 1
      %p91 = scmp.eq.s32.totalorder %s18, 1
      %p92 = scmp.ne.s32.totalorder %s87, %s89
      %p93 = scmp.eq.s32.totalorder %s18, 0
      %p94 = por %p92, %p93
      %p95 = scmp.ne.s32.totalorder %s87, %s89
      %p96 = scmp.eq.s32.totalorder %s23, 1
      %p97 = por %p95, %p96
      %p98 = scmp.ne.s32.totalorder %s89, %s90
      %p99 = scmp.eq.s32.totalorder %s23, 0
      %p100 = por %p98, %p99
      %p101 = scmp.ne.s32.totalorder %s89, %s90
      %p102 = scmp.eq.s32.totalorder %s24, 1
      %p103 = por %p101, %p102
      %p105 = scmp.ne.s32.totalorder %s90, %s104
      %p106 = scmp.eq.s32.totalorder %s24, 0
      %p107 = por %p105, %p106
      %s108 = sadd.s32 %s25, %s26
      %s109 = sadd.s32 %s37, %s33
      %s110 = ssub.s32 %s108, %s109
      %p111 = scmp.eq.s32.totalorder %s110, 0
      %s113 = sadd.s32 %s112, 1
      %s114 = scalar_select %p111, %s112, %s113
      %p117 = pneg %p111
      %p118 = scmp.eq.s32.totalorder %s18, 1
      %p119 = por %p117, %p118
      %p120 = scmp.ne.s32.totalorder %s112, %s115
      %p121 = scmp.eq.s32.totalorder %s18, 0
      %p122 = por %p120, %p121
      %p123 = scmp.ne.s32.totalorder %s112, %s115
      %p124 = scmp.eq.s32.totalorder %s23, 1
      %p125 = por %p123, %p124
      %p126 = scmp.ne.s32.totalorder %s115, %s116
      %p127 = scmp.eq.s32.totalorder %s23, 0
      %p128 = por %p126, %p127
      %p129 = scmp.ne.s32.totalorder %s115, %s116
      %p130 = scmp.eq.s32.totalorder %s24, 1
      %p131 = por %p129, %p130
      %p133 = scmp.ne.s32.totalorder %s116, %s132
      %p134 = scmp.eq.s32.totalorder %s24, 0
      %p135 = por %p133, %p134
      %s136 = ssub.s32 %s25, %s37
      %p137 = scmp.eq.s32.totalorder %s136, 0
      %s139 = sadd.s32 %s138, 1
      %s140 = scalar_select %p137, %s138, %s139
      %p143 = pneg %p137
      %p144 = scmp.eq.s32.totalorder %s18, 1
      %p145 = por %p143, %p144
      %p146 = scmp.ne.s32.totalorder %s138, %s141
      %p147 = scmp.eq.s32.totalorder %s18, 0
      %p148 = por %p146, %p147
      %p149 = scmp.ne.s32.totalorder %s138, %s141
      %p150 = scmp.eq.s32.totalorder %s23, 1
      %p151 = por %p149, %p150
      %p152 = scmp.ne.s32.totalorder %s141, %s142
      %p153 = scmp.eq.s32.totalorder %s23, 0
      %p154 = por %p152, %p153
      %p155 = scmp.ne.s32.totalorder %s141, %s142
      %p156 = scmp.eq.s32.totalorder %s24, 1
      %p157 = por %p155, %p156
      %p159 = scmp.ne.s32.totalorder %s142, %s158
      %p160 = scmp.eq.s32.totalorder %s24, 0
      %p161 = por %p159, %p160
      %s162 = ssub.s32 %s25, %s37
      %p163 = scmp.eq.s32.totalorder %s162, 0
      %s165 = sadd.s32 %s164, 1
      %s166 = scalar_select %p163, %s164, %s165
      %p169 = pneg %p163
      %p170 = scmp.eq.s32.totalorder %s18, 1
      %p171 = por %p169, %p170
      %p172 = scmp.ne.s32.totalorder %s164, %s167
      %p173 = scmp.eq.s32.totalorder %s18, 0
      %p174 = por %p172, %p173
      %p175 = scmp.ne.s32.totalorder %s164, %s167
      %p176 = scmp.eq.s32.totalorder %s23, 1
      %p177 = por %p175, %p176
      %p178 = scmp.ne.s32.totalorder %s167, %s168
      %p179 = scmp.eq.s32.totalorder %s23, 0
      %p180 = por %p178, %p179
      %p181 = scmp.ne.s32.totalorder %s167, %s168
      %p182 = scmp.eq.s32.totalorder %s24, 1
      %p183 = por %p181, %p182
      %p185 = scmp.ne.s32.totalorder %s168, %s184
      %p186 = scmp.eq.s32.totalorder %s24, 0
      %p187 = por %p185, %p186
      %p188 = scmp.le.s32.totalorder 1, %s18
      %p189 = scmp.lt.s32.totalorder %s18, 3
      %p190 = pnand %p188, %p189
      %p191 = pneg %p190
      // Predicated region
      $region9: #{tpu_custom_call.1} parent=5 // pred_check
        _
      $region10: #{tpu_custom_call.1} parent=5 // pred_check_branch
        %193 = sbr.rel (%p190) target = $region12
      $region11: #{tpu_custom_call.1} parent=5 // pred_region
        %s194 = ssub.s32 %s18, 1
        // Predicated region
        $region13: #{tpu_custom_call.1} parent=11 // pred_check
          %p195 = pneg %p79
        $region14: #{tpu_custom_call.1} parent=11 // pred_check_branch
          %197 = sbr.rel (%p195) target = $region16
        $region15: #{tpu_custom_call.1} parent=11 // pred_region
          _
        $region16: #{tpu_custom_call.1} parent=11 // pred_fallthru
          _
        // Predicated region
        $region17: #{tpu_custom_call.1} parent=11 // pred_check
          %p198 = pneg %p100
        $region18: #{tpu_custom_call.1} parent=11 // pred_check_branch
          %200 = sbr.rel (%p198) target = $region20
        $region19: #{tpu_custom_call.1} parent=11 // pred_region
          _
        $region20: #{tpu_custom_call.1} parent=11 // pred_fallthru
          _
      $region12: #{tpu_custom_call.1} parent=5 // pred_fallthru
        _
      %p201 = scmp.lt.s32.totalorder %s18, 2
      // Predicated region
      $region21: #{tpu_custom_call.1} parent=5 // pred_check
        %p202 = pneg %p201
      $region22: #{tpu_custom_call.1} parent=5 // pred_check_branch
        %204 = sbr.rel (%p202) target = $region24
      $region23: #{tpu_custom_call.1} parent=5 // pred_region
        // Predicated region
        $region25: #{tpu_custom_call.1} parent=23 // pred_check
          %p205 = pneg %p52
        $region26: #{tpu_custom_call.1} parent=23 // pred_check_branch
          %207 = sbr.rel (%p205) target = $region28
        $region27: #{tpu_custom_call.1} parent=23 // pred_region
          %s208 = sadd.s32 %s25, %s26
          %s209 = smul.u32 2, %s208
          %p210 = scmp.lt.s32.totalorder %s209, 3
          %s211 = scalar_select %p210, %s209, 3
          %s212 = smul.addr %s211, 2
          %s213 = smul.addr %s212, 8
          %s214 = scalar_lea.vmem %s0, %s213
          %s215 = sadd.s32 %s25, %s26
          %s216 = smul.u32 2, %s215
        $region28: #{tpu_custom_call.1} parent=23 // pred_fallthru
          _
      $region24: #{tpu_custom_call.1} parent=5 // pred_fallthru
        _
      %p217 = scmp.le.s32.totalorder 1, %s18
      %p218 = scmp.lt.s32.totalorder %s18, 3
      %p219 = pnand %p217, %p218
      %p220 = pneg %p219
      // Predicated region
      $region29: #{tpu_custom_call.1} parent=5 // pred_check
        _
      $region30: #{tpu_custom_call.1} parent=5 // pred_check_branch
        %222 = sbr.rel (%p219) target = $region32
      $region31: #{tpu_custom_call.1} parent=5 // pred_region
        %s223 = ssub.s32 %s18, 1
        %s224 = sadd.s32 %s27, %s28
        %s225 = smul.u32 2, %s224
        %p226 = scmp.lt.s32.totalorder %s225, 3
        %s227 = scalar_select %p226, %s225, 3
        %s228 = smul.addr %s227, 2
        %s229 = smul.addr %s228, 8
        %s230 = scalar_lea.vmem %s0, %s229
        %p231 = pneg %p58
        %p232 = pneg %p55
        %p233 = pneg %p79
        %p234 = pneg %p76
        %p235 = pneg %p100
        %p236 = pneg %p97
        %p237 = pneg %p128
        %p238 = pneg %p125
        %s239 = sand.u32 %s115, 1
        %s240 = scalar_lea.sflag [#allocation3], %s239
        %s241 = sand.u32 %s115, 1
        %s242 = smul.addr %s241, 16
        %s243 = scalar_lea.vmem [#allocation2], %s242
        %p244 = pneg %p154
        %p245 = pneg %p151
        %s246 = sand.u32 %s23, 1
        %s247 = scalar_lea.sflag [#allocation5], %s246
        %s248 = sand.u32 %s141, 1
        %s249 = smul.addr %s248, 8
        %s250 = scalar_lea.vmem [#allocation4], %s249
        %p251 = pneg %p180
        %p252 = pneg %p177
        %s253 = sand.u32 %s23, 1
        %s254 = scalar_lea.sflag [#allocation5], %s253
        %s255 = sand.u32 %s167, 1
        %s256 = smul.addr %s255, 8
        %s257 = scalar_lea.vmem [#allocation6], %s256
        %s258 = sadd.s32 %s27, %s28
        %s259 = smul.u32 2, %s258
        %p260 = scmp.lt.s32.totalorder %s259, 3
        %s261 = scalar_select %p260, %s259, 3
        %s262 = smul.addr %s261, 2
        %s263 = smul.addr %s262, 8
        %s264 = scalar_lea.vmem %s0, %s263
        %s265 = sadd.s32 %s27, %s28
        %s266 = smul.u32 2, %s265
        %s267 = sadd.s32 %s27, %s28
        %s268 = smul.u32 2, %s267
        %p269 = scmp.eq.s32.totalorder %s28, 0
        // Predicated region
        $region33: #{tpu_custom_call.1} parent=31 // pred_check
          %p270 = pneg %p269
        $region34: #{tpu_custom_call.1} parent=31 // pred_check_branch
          %272 = sbr.rel (%p270) target = $region36
        $region35: #{tpu_custom_call.1} parent=31 // pred_region
          %vm273 = vcmask 523264
          %274 = vst.msk [vmem:[%s250] sm:$0xff] %vm273, 0.0
          %275 = vst.msk [vmem:[%s257] sm:$0xff] %vm273, 0.0
        $region36: #{tpu_custom_call.1} parent=31 // pred_fallthru
          _
        %v276 = vld [vmem:[%s264] sm:$0xff]
        %v277 = vld [vmem:[%s264 + $0x8] sm:$0xff]
        %v278 = vld [vmem:[%s264 + $0x10] sm:$0xff]
        %v279 = vld [vmem:[%s264 + $0x18] sm:$0xff]
        %v280 = vld [vmem:[%s1] sm:$0xff]
        %v281 = vld [vmem:[%s1 + $0x8] sm:$0xff]
        %v282 = vld [vmem:[%s1 + $0x10] sm:$0xff]
        %v283 = vld [vmem:[%s1 + $0x18] sm:$0xff]
        %v284 = vld [vmem:[%s1 + $0x20] sm:$0xff]
        %v285 = vld [vmem:[%s1 + $0x28] sm:$0xff]
        %v286 = vld [vmem:[%s1 + $0x30] sm:$0xff]
        %v287 = vld [vmem:[%s1 + $0x38] sm:$0xff]
        %v288 = vld [vmem:[%s1 + $0x40] sm:$0xff]
        %v289 = vld [vmem:[%s1 + $0x48] sm:$0xff]
        %v290 = vld [vmem:[%s1 + $0x50] sm:$0xff]
        %v291 = vld [vmem:[%s1 + $0x58] sm:$0xff]
        %v292 = vld [vmem:[%s1 + $0x60] sm:$0xff]
        %v293 = vld [vmem:[%s1 + $0x68] sm:$0xff]
        %v294 = vld [vmem:[%s1 + $0x70] sm:$0xff]
        %v295 = vld [vmem:[%s1 + $0x78] sm:$0xff]
        %v296 = vld [vmem:[%s1 + $0x80] sm:$0xff]
        %v297 = vld [vmem:[%s1 + $0x88] sm:$0xff]
        %v298 = vld [vmem:[%s1 + $0x90] sm:$0xff]
        %v299 = vld [vmem:[%s1 + $0x98] sm:$0xff]
        %v300 = vld [vmem:[%s1 + $0xa0] sm:$0xff]
        %v301 = vld [vmem:[%s1 + $0xa8] sm:$0xff]
        %v302 = vld [vmem:[%s1 + $0xb0] sm:$0xff]
        %v303 = vld [vmem:[%s1 + $0xb8] sm:$0xff]
        %v304 = vld [vmem:[%s1 + $0xc0] sm:$0xff]
        %v305 = vld [vmem:[%s1 + $0xc8] sm:$0xff]
        %v306 = vld [vmem:[%s1 + $0xd0] sm:$0xff]
        %v307 = vld [vmem:[%s1 + $0xd8] sm:$0xff]
        %v308 = vld [vmem:[%s1 + $0xe0] sm:$0xff]
        %v309 = vld [vmem:[%s1 + $0xe8] sm:$0xff]
        %v310 = vld [vmem:[%s1 + $0xf0] sm:$0xff]
        %v311 = vld [vmem:[%s1 + $0xf8] sm:$0xff]
        %312 = vmatprep.subr.mxu0 0.0
        %313 = vmatpush1.msra.mxu0 %v280
        %314 = vmatprep.subr.mxu0 0.0
        %315 = vmatpush1.msra.mxu0 %v281
        %316 = vmatprep.subr.mxu0 0.0
        %317 = vmatpush1.msra.mxu0 %v282
        %318 = vmatprep.subr.mxu0 0.0
        %319 = vmatpush1.msra.mxu0 %v283
        %320 = vmatprep.subr.mxu0 0.0
        %321 = vmatpush1.msra.mxu0 %v284
        %322 = vmatprep.subr.mxu0 0.0
        %323 = vmatpush1.msra.mxu0 %v285
        %324 = vmatprep.subr.mxu0 0.0
        %325 = vmatpush1.msra.mxu0 %v286
        %326 = vmatprep.subr.mxu0 0.0
        %327 = vmatpush1.msra.mxu0 %v287
        %328 = vmatprep.subr.mxu0 0.0
        %329 = vmatpush1.msra.mxu0 %v288
        %330 = vmatprep.subr.mxu0 0.0
        %331 = vmatpush1.msra.mxu0 %v289
        %332 = vmatprep.subr.mxu0 0.0
        %333 = vmatpush1.msra.mxu0 %v290
        %334 = vmatprep.subr.mxu0 0.0
        %335 = vmatpush1.msra.mxu0 %v291
        %336 = vmatprep.subr.mxu0 0.0
        %337 = vmatpush1.msra.mxu0 %v292
        %338 = vmatprep.subr.mxu0 0.0
        %339 = vmatpush1.msra.mxu0 %v293
        %340 = vmatprep.subr.mxu0 0.0
        %341 = vmatpush1.msra.mxu0 %v294
        %342 = vmatprep.subr.mxu0 0.0
        %343 = vmatpush1.msra.mxu0 %v295
        %344 = vmatprep.subr.mxu0 0.0
        %345 = vmatpush1.msra.mxu0 %v296
        %346 = vmatprep.subr.mxu0 0.0
        %347 = vmatpush1.msra.mxu0 %v297
        %348 = vmatprep.subr.mxu0 0.0
        %349 = vmatpush1.msra.mxu0 %v298
        %350 = vmatprep.subr.mxu0 0.0
        %351 = vmatpush1.msra.mxu0 %v299
        %352 = vmatprep.subr.mxu0 0.0
        %353 = vmatpush1.msra.mxu0 %v300
        %354 = vmatprep.subr.mxu0 0.0
        %355 = vmatpush1.msra.mxu0 %v301
        %356 = vmatprep.subr.mxu0 0.0
        %357 = vmatpush1.msra.mxu0 %v302
        %358 = vmatprep.subr.mxu0 0.0
        %359 = vmatpush1.msra.mxu0 %v303
        %360 = vmatprep.subr.mxu0 0.0
        %361 = vmatpush1.msra.mxu0 %v304
        %362 = vmatprep.subr.mxu0 0.0
        %363 = vmatpush1.msra.mxu0 %v305
        %364 = vmatprep.subr.mxu0 0.0
        %365 = vmatpush1.msra.mxu0 %v306
        %366 = vmatprep.subr.mxu0 0.0
        %367 = vmatpush1.msra.mxu0 %v307
        %368 = vmatprep.subr.mxu0 0.0
        %369 = vmatpush1.msra.mxu0 %v308
        %370 = vmatprep.subr.mxu0 0.0
        %371 = vmatpush1.msra.mxu0 %v309
        %372 = vmatprep.subr.mxu0 0.0
        %373 = vmatpush1.msra.mxu0 %v310
        %374 = vmatprep.subr.mxu0 0.0
        %375 = vmatpush1.msra.mxu0 %v311
        %376 = vmatprep.mubr.f32.mxu0 %v277
        %377 = vmatmul.mubr.f32.gmra.mrb[0].mxu0 %v276
        %v378 = vpop.f32.mrb[0].mxu0
        %v379 = vadd.f32 0.0, %v378
        %v380 = vpop.f32.mrb[0].mxu0
        %381 = vmatprep.mubr.f32.mxu0 %v279
        %382 = vmatmul.mubr.f32.gmra.mrb[0].mxu0 %v278
        %v383 = vpop.f32.mrb[0].mxu0
        %v384 = vadd.f32 0.0, %v383
        %v385 = vpop.f32.mrb[0].mxu0
        %386 = vdwg.mxu0
        %vm387 = vcmask 523264
        %388 = vst.msk [vmem:[%s243] sm:$0xff] %vm387, %v379
        %389 = vst.msk [vmem:[%s243 + $0x8] sm:$0xff] %vm387, %v384
        %v390 = vld [vmem:[%s2] sm:$0x1]
        %v392 = vlaneseq
        %v393 = vshrl.u32 %v392, 7
        %v394 = vsub.s32 0, %v393
        %v395 = vrot.slane %v390, %v394
        %v397 = vsub.f32 %v379, %v395
        %v398 = vsub.f32 %v384, %v395
        %v399 = vld [vmem:[%s250] sm:$0xff]
        %v400 = vsel %vm387, %v397, 0.0
        %v401 = vsel %vm387, %v398, 0.0
        %v402 = vadd.f32 %v400, %v401
        %v403 = vrot.slane %v402, 4
        %v404 = vadd.f32 %v402, %v403
        %v405 = vrot.slane %v404, 2
        %v406 = vadd.f32 %v404, %v405
        %v407 = vrot.slane %v406, 1
        %v408 = vadd.f32 %v406, %v407
        %v409 = vadd.f32 %v399, %v408
        %410 = vst.msk [vmem:[%s250] sm:$0xff] %vm387, %v409
        %v411 = vld [vmem:[%s257] sm:$0xff]
        %v412 = vmul.f32 %v397, %v397
        %v413 = vmul.f32 %v398, %v398
        %v414 = vsel %vm387, %v412, 0.0
        %v415 = vsel %vm387, %v413, 0.0
        %v416 = vadd.f32 %v414, %v415
        %v417 = vrot.slane %v416, 4
        %v418 = vadd.f32 %v416, %v417
        %v419 = vrot.slane %v418, 2
        %v420 = vadd.f32 %v418, %v419
        %v421 = vrot.slane %v420, 1
        %v422 = vadd.f32 %v420, %v421
        %v423 = vadd.f32 %v411, %v422
        %424 = vst.msk [vmem:[%s257] sm:$0xff] %vm387, %v423
        %s425 = sand.u32 %s115, 1
        %s426 = scalar_lea.sflag [#allocation3], %s425
        %s427 = sand.u32 %s115, 1
        %s428 = smul.addr %s427, 16
        %s429 = scalar_lea.vmem [#allocation2], %s428
        %s430 = sand.u32 %s23, 1
        %s431 = scalar_lea.sflag [#allocation5], %s430
        %s432 = sand.u32 %s141, 1
        %s433 = smul.addr %s432, 8
        %s434 = scalar_lea.vmem [#allocation4], %s433
        %s435 = sand.u32 %s23, 1
        %s436 = scalar_lea.sflag [#allocation5], %s435
        %s437 = sand.u32 %s167, 1
        %s438 = smul.addr %s437, 8
        %s439 = scalar_lea.vmem [#allocation6], %s438
        // Predicated region
        $region37: #{tpu_custom_call.1} parent=31 // pred_check
          %p440 = pneg %p125
        $region38: #{tpu_custom_call.1} parent=31 // pred_check_branch
          %442 = sbr.rel (%p440) target = $region40
        $region39: #{tpu_custom_call.1} parent=31 // pred_region
          %s443 = sadd.s32 %s27, %s28
          %s444 = smul.u32 2, %s443
          %s446 = ssub.s32 256, 256
          %447 = vsyncadd %s426, %s446
          %s448 = smul.addr %s444, 128
          %s449 = scalar_lea.hbm %s3, %s448
          %s450 = sshll.u32 %s429, 4
          %s451 = int_to_ptr.vmem [resolvable:$true] %s450
          %456 = dma.vmem_to_hbm [thread:$0]  %s451, 256, %s449, %s426, 128, 128, 8
        $region40: #{tpu_custom_call.1} parent=31 // pred_fallthru
          _
        // Predicated region
        $region41: #{tpu_custom_call.1} parent=31 // pred_check
          %p457 = pneg %p151
        $region42: #{tpu_custom_call.1} parent=31 // pred_check_branch
          %459 = sbr.rel (%p457) target = $region44
        $region43: #{tpu_custom_call.1} parent=31 // pred_region
          %s461 = ssub.s32 128, 128
          %462 = vsyncadd %s431, %s461
          %s463 = smul.addr %s27, 128
          %s464 = scalar_lea.hbm %s4, %s463
          %s466 = sshll.u32 %s434, 4
          %s467 = int_to_ptr.vmem [resolvable:$true] %s466
          %469 = dma.vmem_to_hbm [thread:$0]  %s467, 128, %s464, %s431
        $region44: #{tpu_custom_call.1} parent=31 // pred_fallthru
          _
        // Predicated region
        $region45: #{tpu_custom_call.1} parent=31 // pred_check
          %p470 = pneg %p177
        $region46: #{tpu_custom_call.1} parent=31 // pred_check_branch
          %472 = sbr.rel (%p470) target = $region48
        $region47: #{tpu_custom_call.1} parent=31 // pred_region
          %s474 = ssub.s32 128, 128
          %475 = vsyncadd %s436, %s474
          %s476 = smul.addr %s27, 128
          %s477 = scalar_lea.hbm %s5, %s476
          %s479 = sshll.u32 %s439, 4
          %s480 = int_to_ptr.vmem [resolvable:$true] %s479
          %482 = dma.vmem_to_hbm [thread:$0]  %s480, 128, %s477, %s436
        $region48: #{tpu_custom_call.1} parent=31 // pred_fallthru
          _
      $region32: #{tpu_custom_call.1} parent=5 // pred_fallthru
        _
      %p483 = scmp.le.s32.totalorder 2, %s18
      // Predicated region
      $region49: #{tpu_custom_call.1} parent=5 // pred_check
        %p484 = pneg %p483
      $region50: #{tpu_custom_call.1} parent=5 // pred_check_branch
        %486 = sbr.rel (%p484) target = $region52
      $region51: #{tpu_custom_call.1} parent=5 // pred_region
        %s487 = ssub.s32 %s18, 2
        // Predicated region
        $region53: #{tpu_custom_call.1} parent=51 // pred_check
          %p488 = pneg %p131
        $region54: #{tpu_custom_call.1} parent=51 // pred_check_branch
          %490 = sbr.rel (%p488) target = $region56
        $region55: #{tpu_custom_call.1} parent=51 // pred_region
          %s491 = sand.u32 %s116, 1
          %s492 = scalar_lea.sflag [#allocation3], %s491
          %s493 = sand.u32 %s116, 1
          %s494 = smul.addr %s493, 16
          %s495 = scalar_lea.vmem [#allocation2], %s494
          %496 = dma.done %s492, 256
        $region56: #{tpu_custom_call.1} parent=51 // pred_fallthru
          _
        // Predicated region
        $region57: #{tpu_custom_call.1} parent=51 // pred_check
          %p497 = pneg %p157
        $region58: #{tpu_custom_call.1} parent=51 // pred_check_branch
          %499 = sbr.rel (%p497) target = $region60
        $region59: #{tpu_custom_call.1} parent=51 // pred_region
          %s500 = sand.u32 %s24, 1
          %s501 = scalar_lea.sflag [#allocation5], %s500
          %s502 = sand.u32 %s142, 1
          %s503 = smul.addr %s502, 8
          %s504 = scalar_lea.vmem [#allocation4], %s503
          %505 = dma.done %s501, 128
        $region60: #{tpu_custom_call.1} parent=51 // pred_fallthru
          _
        // Predicated region
        $region61: #{tpu_custom_call.1} parent=51 // pred_check
          %p506 = pneg %p183
        $region62: #{tpu_custom_call.1} parent=51 // pred_check_branch
          %508 = sbr.rel (%p506) target = $region64
        $region63: #{tpu_custom_call.1} parent=51 // pred_region
          %s509 = sand.u32 %s24, 1
          %s510 = scalar_lea.sflag [#allocation5], %s509
          %s511 = sand.u32 %s168, 1
          %s512 = smul.addr %s511, 8
          %s513 = scalar_lea.vmem [#allocation6], %s512
          %514 = dma.done %s510, 128
        $region64: #{tpu_custom_call.1} parent=51 // pred_fallthru
          _
      $region52: #{tpu_custom_call.1} parent=5 // pred_fallthru
        _
    $region6: #{tpu_custom_call.1} parent=1 // loop_footer
      %s22 = sadd.s32 1, %s18
    $region7: #{tpu_custom_call.1} parent=1 // loop_footer_branch
      %17 = sbr.rel target = $region3
    $region8: #{tpu_custom_call.1} parent=1 // loop_exit
      _
    %515 = vsyncpa [#allocation3], 1
    %s516 = scalar_lea.sflag [#allocation3], 1
    %517 = vsyncpa %s516, 1
    %518 = vsyncpa [#allocation5], 1
    %s519 = scalar_lea.sflag [#allocation5], 1
    %520 = vsyncpa %s519, 1

</llo_original>
